<compile_context>
chip_gen: v5e
topology: v5e:2x2
jax: 0.10.0
libtpu: 0.0.40
codegen_flags: <defaults>
</compile_context>

<pallas_src>
import functools

import jax
import jax.numpy as jnp
from jax.experimental import pallas as pl
from jax.experimental.pallas import tpu as pltpu

_LANE = 128


def _round_up(n, m):
    return (n + m - 1) // m * m


# --------------------------------------------------------------------------- #
# Kernel: one batch tile, one time step per grid point (grid = (batch_tiles, T))
# --------------------------------------------------------------------------- #
def _rnn_seq_kernel(
    # inputs
    x_ref, h0_ref,
    w1_ref, b1_ref,
    wih_ref, whh_ref, bg_ref,
    w2_ref, b2_ref,
    # outputs
    q_ref, h_ref,
):
    f32 = jnp.float32
    Hp = w1_ref.shape[1]          # padded hidden width (multiple of 128)
    wdt = w1_ref.dtype            # MXU dtype (bf16 in production, f32 for checks)
    t = pl.program_id(1)

    @pl.when(t == 0)
    def _():                      # load the initial hidden state once per batch tile
        h_ref[...] = h0_ref[...]

    h = h_ref[...]                # f32 carry, resident across the time axis

    # fc1 + ReLU  (f32 accumulate, f32 elementwise)
    x1 = jnp.dot(x_ref[0], w1_ref[...], preferred_element_type=f32)
    x1 = jnp.maximum(x1 + b1_ref[...], 0.0)

    # GRUCell: fused 3-gate matmuls; gates (r, z, n) each occupy their own
    # 128-lane-aligned Hp tile, so the static slices below never cut a vreg.
    bg = bg_ref[...]                                              # (2, 3Hp): [b_ih; b_hh]
    gi = jnp.dot(x1.astype(wdt), wih_ref[...], preferred_element_type=f32) + bg[0:1, :]
    gh = jnp.dot(h.astype(wdt), whh_ref[...], preferred_element_type=f32) + bg[1:2, :]

    i_r, i_z, i_n = gi[:, :Hp], gi[:, Hp:2 * Hp], gi[:, 2 * Hp:]
    h_r, h_z, h_n = gh[:, :Hp], gh[:, Hp:2 * Hp], gh[:, 2 * Hp:]

    r = jax.nn.sigmoid(i_r + h_r)
    z = jax.nn.sigmoid(i_z + h_z)
    n = jnp.tanh(i_n + r * h_n)
    h_new = (1.0 - z) * n + z * h

    # fc2
    q = jnp.dot(h_new.astype(wdt), w2_ref[...], preferred_element_type=f32) + b2_ref[...]

    q_ref[0] = q
    h_ref[...] = h_new


# --------------------------------------------------------------------------- #
# Parameters
# --------------------------------------------------------------------------- #
def init_params(key, input_shape, n_actions, rnn_hidden_dim, dtype=jnp.float32):
    """Deterministic synthetic parameters matching nn.Linear / nn.GRUCell shapes."""
    H = rnn_hidden_dim
    ks = jax.random.split(key, 8)

    def uniform(k, shape, bound):
        return jax.random.uniform(k, shape, dtype, minval=-bound, maxval=bound)

    b1s = 1.0 / jnp.sqrt(input_shape)
    gbs = 1.0 / jnp.sqrt(H)
    return dict(
        fc1_w=uniform(ks[0], (H, input_shape), b1s),
        fc1_b=uniform(ks[1], (H,), b1s),
        w_ih=uniform(ks[2], (3 * H, H), gbs),     # rows: [W_ir; W_iz; W_in]
        w_hh=uniform(ks[3], (3 * H, H), gbs),
        b_ih=uniform(ks[4], (3 * H,), gbs),
        b_hh=uniform(ks[5], (3 * H,), gbs),
        fc2_w=uniform(ks[6], (n_actions, H), gbs),
        fc2_b=uniform(ks[7], (n_actions,), gbs),
    )


def prepare_params(params, compute_dtype=jnp.bfloat16):
    """One-time layout prep (outside the hot path).

    * weights transposed to [in, out] and cast to the MXU compute dtype,
    * H and n_actions zero-padded up to multiples of 128 (lane-dense stores;
      each GRU gate gets its own 128-lane tile so in-kernel gate slices are free),
    * the two GRU bias vectors packed into one (2, 3*Hp) f32 array,
    * biases (and hence all elementwise gate math) stay f32.
    """
    f32 = jnp.float32
    fc1_w = jnp.asarray(params["fc1_w"], f32)     # (H, D_in)
    fc1_b = jnp.asarray(params["fc1_b"], f32)
    w_ih = jnp.asarray(params["w_ih"], f32)       # (3H, H)
    w_hh = jnp.asarray(params["w_hh"], f32)
    b_ih = jnp.asarray(params["b_ih"], f32)
    b_hh = jnp.asarray(params["b_hh"], f32)
    fc2_w = jnp.asarray(params["fc2_w"], f32)     # (A, H)
    fc2_b = jnp.asarray(params["fc2_b"], f32)

    H, D = fc1_w.shape
    A = fc2_w.shape[0]
    Hp = _round_up(H, _LANE)
    Ap = _round_up(A, _LANE)

    def pad_to(x, shape):
        return jnp.pad(x, [(0, s - d) for d, s in zip(x.shape, shape)])

    def gate_slab(w):       # (3H, H) -> (Hp, 3*Hp), one 128-lane tile per gate
        return jnp.concatenate(
            [pad_to(w[g * H:(g + 1) * H, :].T, (Hp, Hp)) for g in range(3)], axis=1)

    def gate_bias(b):       # (3H,) -> (3*Hp,)
        return jnp.concatenate(
            [pad_to(b[g * H:(g + 1) * H], (Hp,)) for g in range(3)])

    weights = dict(
        w1=pad_to(fc1_w.T, (D, Hp)).astype(compute_dtype),           # (D_in, Hp)
        b1=pad_to(fc1_b.reshape(1, H), (1, Hp)),                     # (1, Hp) f32
        w_ih_t=gate_slab(w_ih).astype(compute_dtype),                # (Hp, 3Hp)
        w_hh_t=gate_slab(w_hh).astype(compute_dtype),                # (Hp, 3Hp)
        b_gru=jnp.stack([gate_bias(b_ih), gate_bias(b_hh)], axis=0), # (2, 3Hp) f32
        w2=pad_to(fc2_w.T, (Hp, Ap)).astype(compute_dtype),          # (Hp, Ap)
        b2=pad_to(fc2_b.reshape(1, A), (1, Ap)),                     # (1, Ap) f32
    )
    return dict(weights=weights, hidden_dim=H, n_actions=A)


# --------------------------------------------------------------------------- #
# Tiling helpers
# --------------------------------------------------------------------------- #
def _num_tensorcores():
    try:
        kind = jax.devices()[0].device_kind.lower()
        return 2 if ("v7" in kind or "7x" in kind) else 1
    except Exception:   # pragma: no cover - defensive
        return 1


def _pick_batch_tile(batch, bytes_per_row, n_cores, vmem_budget_bytes=8 << 20):
    """Largest sublane-aligned batch tile whose double-buffered streamed/carried
    blocks fit the VMEM budget; guarantees >= n_cores blocks on multi-TC chips
    (v7x) while keeping a single big block on 1-TC chips (v5e/v6e)."""
    tb = max(8, (vmem_budget_bytes // (2 * bytes_per_row)) // 8 * 8)
    if n_cores > 1 and batch > 8 * n_cores:
        tb = min(tb, _round_up(-(-batch // n_cores), 8))
    return int(min(tb, _round_up(batch, 8)))


# --------------------------------------------------------------------------- #
# Forward (padded core + jit wrappers)
# --------------------------------------------------------------------------- #
def _rnn_forward_padded(weights, x_seq, h_in, hidden_dim, n_actions):
    w1, b1 = weights["w1"], weights["b1"]
    wih, whh, bg = weights["w_ih_t"], weights["w_hh_t"], weights["b_gru"]
    w2, b2 = weights["w2"], weights["b2"]

    T, B, D = x_seq.shape
    Hp = w1.shape[1]
    Ap = w2.shape[1]
    wdt = w1.dtype
    isz = jnp.dtype(wdt).itemsize

    # Batch tiling: VMEM-budget driven, generation aware, batch padded to the tile.
    bytes_per_row = D * isz + Ap * 4 + 2 * Hp * 4       # x_t + q_t + (h0, h carry)
    tb = _pick_batch_tile(B, bytes_per_row, _num_tensorcores())
    Bp = _round_up(B, tb)

    xp = x_seq.astype(wdt)                              # stream activations in MXU dtype
    if Bp != B:
        xp = jnp.pad(xp, ((0, 0), (0, Bp - B), (0, 0)))
    hp = h_in.astype(jnp.float32)
    if Bp != B or Hp != hidden_dim:
        hp = jnp.pad(hp, ((0, Bp - B), (0, Hp - hidden_dim)))

    weight_bytes = (w1.size + wih.size + whh.size + w2.size) * isz \
        + (b1.size + bg.size + b2.size) * 4
    block_bytes = tb * bytes_per_row
    vmem_limit = int(min(64 << 20,
                         max(16 << 20, 2 * (weight_bytes + block_bytes) + (4 << 20))))

    resident = lambda b, t: (0, 0)
    stream = lambda b, t: (t, b, 0)
    carry = lambda b, t: (b, 0)

    grid = (Bp // tb, T)
    q_pad, h_pad = pl.pallas_call(
        _rnn_seq_kernel,
        out_shape=(
            jax.ShapeDtypeStruct((T, Bp, Ap), jnp.float32),
            jax.ShapeDtypeStruct((Bp, Hp), jnp.float32),
        ),
        grid=grid,
        in_specs=[
            pl.BlockSpec((1, tb, D), stream),           # x_t
            pl.BlockSpec((tb, Hp), carry),              # h0 (read once per tile)
            pl.BlockSpec((D, Hp), resident),            # W1^T
            pl.BlockSpec((1, Hp), resident),            # b1
            pl.BlockSpec((Hp, 3 * Hp), resident),       # W_ih^T (gate-tiled)
            pl.BlockSpec((Hp, 3 * Hp), resident),       # W_hh^T (gate-tiled)
            pl.BlockSpec((2, 3 * Hp), resident),        # [b_ih; b_hh]
            pl.BlockSpec((Hp, Ap), resident),           # W2^T
            pl.BlockSpec((1, Ap), resident),            # b2
        ],
        out_specs=(
            pl.BlockSpec((1, tb, Ap), stream),          # q_t
            pl.BlockSpec((tb, Hp), carry),              # h carry, written back once per tile
        ),
        # Hidden state updated in place (h0 is operand 1, h is output 1).
        input_output_aliases={1: 1},
        compiler_params=pltpu.CompilerParams(
            dimension_semantics=("parallel", "arbitrary"),
            vmem_limit_bytes=vmem_limit,
        ),
    )(xp, hp, w1, b1, wih, whh, bg, w2, b2)

    return q_pad[:, :B, :n_actions], h_pad[:B, :hidden_dim]


@functools.partial(jax.jit, static_argnames=("hidden_dim", "n_actions"),
                   donate_argnames=("h_in",))
def _rnn_step_jit(weights, x, h_in, *, hidden_dim, n_actions):
    q_seq, h = _rnn_forward_padded(weights, x[None], h_in, hidden_dim, n_actions)
    return q_seq[0], h


@functools.partial(jax.jit, static_argnames=("hidden_dim", "n_actions"),
                   donate_argnames=("h_in",))
def _rnn_seq_jit(weights, x_seq, h_in, *, hidden_dim, n_actions):
    return _rnn_forward_padded(weights, x_seq, h_in, hidden_dim, n_actions)


def rnn_forward(prepared, inputs, hidden_state):
    """Single-step forward: exact semantics of RNN.forward(inputs, hidden_state)."""
    H, A = prepared["hidden_dim"], prepared["n_actions"]
    h_in = hidden_state.reshape(-1, H)          # same glue as the PyTorch forward
    return _rnn_step_jit(prepared["weights"], inputs, h_in, hidden_dim=H, n_actions=A)


def rnn_forward_seq(prepared, inputs_seq, hidden_state):
    """Fused T-step rollout of the same cell: one pallas_call, weights resident,
    hidden state carried in VMEM.  Returns (q per step, final hidden state)."""
    H, A = prepared["hidden_dim"], prepared["n_actions"]
    h_in = hidden_state.reshape(-1, H)
    return _rnn_seq_jit(prepared["weights"], inputs_seq, h_in, hidden_dim=H, n_actions=A)


# --------------------------------------------------------------------------- #
# Pure-JAX reference (PyTorch module semantics, f32)
# --------------------------------------------------------------------------- #
def rnn_forward_ref(params, inputs, hidden_state, rnn_hidden_dim):
    H = rnn_hidden_dim
    x = jax.nn.relu(inputs @ params["fc1_w"].T + params["fc1_b"])
    h = hidden_state.reshape(-1, H)
    gi = x @ params["w_ih"].T + params["b_ih"]
    gh = h @ params["w_hh"].T + params["b_hh"]
    i_r, i_z, i_n = gi[:, :H], gi[:, H:2 * H], gi[:, 2 * H:]
    h_r, h_z, h_n = gh[:, :H], gh[:, H:2 * H], gh[:, 2 * H:]
    r = jax.nn.sigmoid(i_r + h_r)
    z = jax.nn.sigmoid(i_z + h_z)
    n = jnp.tanh(i_n + r * h_n)
    h_new = (1.0 - z) * n + z * h
    q = h_new @ params["fc2_w"].T + params["fc2_b"]
    return q, h_new


if __name__ == "__main__":
    B, D_IN, N_ACTIONS, HIDDEN, T = 8, 16, 8, 32, 6

    key = jax.random.PRNGKey(0)
    kp, kx, kh, ks = jax.random.split(key, 4)

    params = init_params(kp, D_IN, N_ACTIONS, HIDDEN)
    inputs = jax.random.normal(kx, (B, D_IN), jnp.float32)
    hidden_state = jax.random.normal(kh, (1, B, HIDDEN), jnp.float32)
    inputs_seq = jax.random.normal(ks, (T, B, D_IN), jnp.float32)

    # ---- single-step forward (module semantics) ----
    q_ref, h_ref = rnn_forward_ref(params, inputs, hidden_state, HIDDEN)

    prep_f32 = prepare_params(params, compute_dtype=jnp.float32)     # verification path
    q32, h32 = rnn_forward(prep_f32, inputs, hidden_state)
    jax.block_until_ready((q32, h32))
    assert q32.shape == (B, N_ACTIONS) and h32.shape == (B, HIDDEN)
    assert jnp.allclose(q32, q_ref, atol=1e-5, rtol=1e-5)
    assert jnp.allclose(h32, h_ref, atol=1e-5, rtol=1e-5)

    prep_bf16 = prepare_params(params)                                # production path
    q16, h16 = rnn_forward(prep_bf16, inputs, hidden_state)
    jax.block_until_ready((q16, h16))
    assert jnp.allclose(q16, q_ref, atol=5e-2, rtol=5e-2)
    assert jnp.allclose(h16, h_ref, atol=5e-2, rtol=5e-2)

    # ---- fused T-step rollout (time loop inside the kernel) ----
    q_seq_ref = []
    h_t = hidden_state
    for t in range(T):
        q_t, h_t = rnn_forward_ref(params, inputs_seq[t], h_t, HIDDEN)
        q_seq_ref.append(q_t)
    q_seq_ref = jnp.stack(q_seq_ref)

    qs32, hT32 = rnn_forward_seq(prep_f32, inputs_seq, hidden_state)
    jax.block_until_ready((qs32, hT32))
    assert qs32.shape == (T, B, N_ACTIONS) and hT32.shape == (B, HIDDEN)
    assert jnp.allclose(qs32, q_seq_ref, atol=1e-4, rtol=1e-4)
    assert jnp.allclose(hT32, h_t, atol=1e-4, rtol=1e-4)

    qs16, hT16 = rnn_forward_seq(prep_bf16, inputs_seq, hidden_state)
    jax.block_until_ready((qs16, hT16))
    assert jnp.allclose(qs16, q_seq_ref, atol=1e-1, rtol=1e-1)        # bf16 drift over T steps
    assert jnp.allclose(hT16, h_t, atol=1e-1, rtol=1e-1)

    print("KERNEL_OK")
</pallas_src>

<mosaic_0001>
module attributes {stable_mosaic.version = 11 : i64} {
  func.func @_rnn_seq_kernel(%arg0: i32, %arg1: i32, %arg2: memref<1x8x16xf32, #tpu.memory_space<vmem>>, %arg3: memref<8x128xf32, #tpu.memory_space<vmem>>, %arg4: memref<16x128xf32, #tpu.memory_space<vmem>>, %arg5: memref<1x128xf32, #tpu.memory_space<vmem>>, %arg6: memref<128x384xf32, #tpu.memory_space<vmem>>, %arg7: memref<128x384xf32, #tpu.memory_space<vmem>>, %arg8: memref<2x384xf32, #tpu.memory_space<vmem>>, %arg9: memref<128x128xf32, #tpu.memory_space<vmem>>, %arg10: memref<1x128xf32, #tpu.memory_space<vmem>>, %arg11: memref<1x8x128xf32, #tpu.memory_space<vmem>>, %arg12: memref<8x128xf32, #tpu.memory_space<vmem>>) attributes {dimension_semantics = [#tpu.dimension_semantics<parallel>, #tpu.dimension_semantics<arbitrary>], iteration_bounds = array<i64: 1, 1>, scalar_prefetch = 0 : i64, scratch_operands = 0 : i64, tpu.core_type = #tpu.core_type<tc>, window_params = [{transform_indices = @transform_0, window_bounds = array<i64: 1, 8, 16>}, {transform_indices = @transform_1, window_bounds = array<i64: 8, 128>}, {pipeline_mode = #tpu.pipeline_mode<synchronous>, transform_indices = @transform_2, window_bounds = array<i64: 16, 128>}, {pipeline_mode = #tpu.pipeline_mode<synchronous>, transform_indices = @transform_3, window_bounds = array<i64: 1, 128>}, {pipeline_mode = #tpu.pipeline_mode<synchronous>, transform_indices = @transform_4, window_bounds = array<i64: 128, 384>}, {pipeline_mode = #tpu.pipeline_mode<synchronous>, transform_indices = @transform_5, window_bounds = array<i64: 128, 384>}, {pipeline_mode = #tpu.pipeline_mode<synchronous>, transform_indices = @transform_6, window_bounds = array<i64: 2, 384>}, {pipeline_mode = #tpu.pipeline_mode<synchronous>, transform_indices = @transform_7, window_bounds = array<i64: 128, 128>}, {pipeline_mode = #tpu.pipeline_mode<synchronous>, transform_indices = @transform_8, window_bounds = array<i64: 1, 128>}, {transform_indices = @transform_9, window_bounds = array<i64: 1, 8, 128>}, {transform_indices = @transform_10, window_bounds = array<i64: 8, 128>}]} {
    %c0_i32 = arith.constant 0 : i32
    %0 = arith.cmpi eq, %arg1, %c0_i32 : i32
    %1 = arith.extui %0 : i1 to i32
    %c0_i32_0 = arith.constant 0 : i32
    %2 = arith.cmpi ne, %1, %c0_i32_0 : i32
    scf.if %2 {
      %c0_31 = arith.constant 0 : index
      %c0_32 = arith.constant 0 : index
      %59 = vector.load %arg3[%c0_31, %c0_32] : memref<8x128xf32, #tpu.memory_space<vmem>>, vector<8x128xf32>
      %c0_33 = arith.constant 0 : index
      %c0_34 = arith.constant 0 : index
      %60 = vector.load %arg12[%c0_33, %c0_34] : memref<8x128xf32, #tpu.memory_space<vmem>>, vector<8x128xf32>
      tpu.vector_store %arg12[%c0_33, %c0_34], %59 {strides = array<i32>} : memref<8x128xf32, #tpu.memory_space<vmem>>, vector<8x128xf32>,
    } else {
    }
    %c0 = arith.constant 0 : index
    %c0_1 = arith.constant 0 : index
    %3 = vector.load %arg12[%c0, %c0_1] : memref<8x128xf32, #tpu.memory_space<vmem>>, vector<8x128xf32>
    %c0_2 = arith.constant 0 : index
    %c0_3 = arith.constant 0 : index
    %c0_4 = arith.constant 0 : index
    %4 = vector.load %arg2[%c0_2, %c0_3, %c0_4] : memref<1x8x16xf32, #tpu.memory_space<vmem>>, vector<1x8x16xf32>
    %5 = vector.shape_cast %4 : vector<1x8x16xf32> to vector<8x16xf32>
    %c0_5 = arith.constant 0 : index
    %c0_6 = arith.constant 0 : index
    %6 = vector.load %arg4[%c0_5, %c0_6] : memref<16x128xf32, #tpu.memory_space<vmem>>, vector<16x128xf32>
    %cst = arith.constant dense<0.000000e+00> : vector<8x128xf32>
    %7 = tpu.matmul %5, %6, %cst {dimension_numbers = #tpu.dot_dimension_numbers<[1], [0], [0], [1], [0, 0, 1, 1], [], []>} : vector<8x16xf32>, vector<16x128xf32>, vector<8x128xf32> -> vector<8x128xf32>
    %c0_7 = arith.constant 0 : index
    %c0_8 = arith.constant 0 : index
    %8 = vector.load %arg5[%c0_7, %c0_8] : memref<1x128xf32, #tpu.memory_space<vmem>>, vector<1x128xf32>
    %9 = vector.broadcast %8 : vector<1x128xf32> to vector<8x128xf32>
    %10 = arith.addf %7, %9 : vector<8x128xf32>
    %cst_9 = arith.constant 0.000000e+00 : f32
    %11 = vector.broadcast %cst_9 : f32 to vector<8x128xf32>
    %12 = arith.maximumf %10, %11 : vector<8x128xf32>
    %c0_10 = arith.constant 0 : index
    %c0_11 = arith.constant 0 : index
    %13 = vector.load %arg8[%c0_10, %c0_11] : memref<2x384xf32, #tpu.memory_space<vmem>>, vector<2x384xf32>
    %c0_12 = arith.constant 0 : index
    %c0_13 = arith.constant 0 : index
    %14 = vector.load %arg6[%c0_12, %c0_13] : memref<128x384xf32, #tpu.memory_space<vmem>>, vector<128x384xf32>
    %cst_14 = arith.constant dense<0.000000e+00> : vector<8x384xf32>
    %15 = tpu.matmul %12, %14, %cst_14 {dimension_numbers = #tpu.dot_dimension_numbers<[1], [0], [0], [1], [0, 0, 1, 1], [], []>} : vector<8x128xf32>, vector<128x384xf32>, vector<8x384xf32> -> vector<8x384xf32>
    %16 = vector.extract_strided_slice %13 {offsets = [0, 0], sizes = [1, 384], strides = [1, 1]} : vector<2x384xf32> to vector<1x384xf32>
    %17 = vector.broadcast %16 : vector<1x384xf32> to vector<8x384xf32>
    %18 = arith.addf %15, %17 : vector<8x384xf32>
    %c0_15 = arith.constant 0 : index
    %c0_16 = arith.constant 0 : index
    %19 = vector.load %arg7[%c0_15, %c0_16] : memref<128x384xf32, #tpu.memory_space<vmem>>, vector<128x384xf32>
    %cst_17 = arith.constant dense<0.000000e+00> : vector<8x384xf32>
    %20 = tpu.matmul %3, %19, %cst_17 {dimension_numbers = #tpu.dot_dimension_numbers<[1], [0], [0], [1], [0, 0, 1, 1], [], []>} : vector<8x128xf32>, vector<128x384xf32>, vector<8x384xf32> -> vector<8x384xf32>
    %21 = vector.extract_strided_slice %13 {offsets = [1, 0], sizes = [1, 384], strides = [1, 1]} : vector<2x384xf32> to vector<1x384xf32>
    %22 = vector.broadcast %21 : vector<1x384xf32> to vector<8x384xf32>
    %23 = arith.addf %20, %22 : vector<8x384xf32>
    %24 = vector.extract_strided_slice %18 {offsets = [0, 0], sizes = [8, 128], strides = [1, 1]} : vector<8x384xf32> to vector<8x128xf32>
    %25 = vector.extract_strided_slice %18 {offsets = [0, 128], sizes = [8, 128], strides = [1, 1]} : vector<8x384xf32> to vector<8x128xf32>
    %26 = vector.extract_strided_slice %18 {offsets = [0, 256], sizes = [8, 128], strides = [1, 1]} : vector<8x384xf32> to vector<8x128xf32>
    %27 = vector.extract_strided_slice %23 {offsets = [0, 0], sizes = [8, 128], strides = [1, 1]} : vector<8x384xf32> to vector<8x128xf32>
    %28 = vector.extract_strided_slice %23 {offsets = [0, 128], sizes = [8, 128], strides = [1, 1]} : vector<8x384xf32> to vector<8x128xf32>
    %29 = vector.extract_strided_slice %23 {offsets = [0, 256], sizes = [8, 128], strides = [1, 1]} : vector<8x384xf32> to vector<8x128xf32>
    %30 = arith.addf %24, %27 : vector<8x128xf32>
    %31 = arith.negf %30 : vector<8x128xf32>
    %32 = math.exp %31 : vector<8x128xf32>
    %cst_18 = arith.constant 1.000000e+00 : f32
    %33 = vector.broadcast %cst_18 : f32 to vector<8x128xf32>
    %34 = arith.addf %33, %32 : vector<8x128xf32>
    %35 = arith.divf %33, %34 : vector<8x128xf32>
    %36 = arith.addf %25, %28 : vector<8x128xf32>
    %37 = arith.negf %36 : vector<8x128xf32>
    %38 = math.exp %37 : vector<8x128xf32>
    %cst_19 = arith.constant 1.000000e+00 : f32
    %39 = vector.broadcast %cst_19 : f32 to vector<8x128xf32>
    %40 = arith.addf %39, %38 : vector<8x128xf32>
    %41 = arith.divf %39, %40 : vector<8x128xf32>
    %42 = arith.mulf %35, %29 : vector<8x128xf32>
    %43 = arith.addf %26, %42 : vector<8x128xf32>
    %44 = math.tanh %43 : vector<8x128xf32>
    %cst_20 = arith.constant 1.000000e+00 : f32
    %45 = vector.broadcast %cst_20 : f32 to vector<8x128xf32>
    %46 = arith.subf %45, %41 : vector<8x128xf32>
    %47 = arith.mulf %46, %44 : vector<8x128xf32>
    %48 = arith.mulf %41, %3 : vector<8x128xf32>
    %49 = arith.addf %47, %48 : vector<8x128xf32>
    %c0_21 = arith.constant 0 : index
    %c0_22 = arith.constant 0 : index
    %50 = vector.load %arg9[%c0_21, %c0_22] : memref<128x128xf32, #tpu.memory_space<vmem>>, vector<128x128xf32>
    %cst_23 = arith.constant dense<0.000000e+00> : vector<8x128xf32>
    %51 = tpu.matmul %49, %50, %cst_23 {dimension_numbers = #tpu.dot_dimension_numbers<[1], [0], [0], [1], [0, 0, 1, 1], [], []>} : vector<8x128xf32>, vector<128x128xf32>, vector<8x128xf32> -> vector<8x128xf32>
    %c0_24 = arith.constant 0 : index
    %c0_25 = arith.constant 0 : index
    %52 = vector.load %arg10[%c0_24, %c0_25] : memref<1x128xf32, #tpu.memory_space<vmem>>, vector<1x128xf32>
    %53 = vector.broadcast %52 : vector<1x128xf32> to vector<8x128xf32>
    %54 = arith.addf %51, %53 : vector<8x128xf32>
    %c0_26 = arith.constant 0 : index
    %c0_27 = arith.constant 0 : index
    %c0_28 = arith.constant 0 : index
    %55 = vector.load %arg11[%c0_26, %c0_27, %c0_28] : memref<1x8x128xf32, #tpu.memory_space<vmem>>, vector<1x8x128xf32>
    %56 = vector.shape_cast %55 : vector<1x8x128xf32> to vector<8x128xf32>
    %57 = vector.shape_cast %54 : vector<8x128xf32> to vector<1x8x128xf32>
    tpu.vector_store %arg11[%c0_26, %c0_27, %c0_28], %57 {strides = array<i32>} : memref<1x8x128xf32, #tpu.memory_space<vmem>>, vector<1x8x128xf32>,
    %c0_29 = arith.constant 0 : index
    %c0_30 = arith.constant 0 : index
    %58 = vector.load %arg12[%c0_29, %c0_30] : memref<8x128xf32, #tpu.memory_space<vmem>>, vector<8x128xf32>
    tpu.vector_store %arg12[%c0_29, %c0_30], %49 {strides = array<i32>} : memref<8x128xf32, #tpu.memory_space<vmem>>, vector<8x128xf32>,
    return
  }
  func.func @transform_0(%arg0: i32, %arg1: i32) -> (i32, i32, i32) {
    %c0_i32 = arith.constant 0 : i32
    %c0_i32_0 = arith.constant 0 : i32
    return %arg1, %arg0, %c0_i32 : i32, i32, i32
  }
  func.func @transform_1(%arg0: i32, %arg1: i32) -> (i32, i32) {
    %c0_i32 = arith.constant 0 : i32
    %c0_i32_0 = arith.constant 0 : i32
    return %arg0, %c0_i32 : i32, i32
  }
  func.func @transform_2(%arg0: i32, %arg1: i32) -> (i32, i32) {
    %c0_i32 = arith.constant 0 : i32
    %c0_i32_0 = arith.constant 0 : i32
    %c0_i32_1 = arith.constant 0 : i32
    return %c0_i32, %c0_i32_0 : i32, i32
  }
  func.func @transform_3(%arg0: i32, %arg1: i32) -> (i32, i32) {
    %c0_i32 = arith.constant 0 : i32
    %c0_i32_0 = arith.constant 0 : i32
    %c0_i32_1 = arith.constant 0 : i32
    return %c0_i32, %c0_i32_0 : i32, i32
  }
  func.func @transform_4(%arg0: i32, %arg1: i32) -> (i32, i32) {
    %c0_i32 = arith.constant 0 : i32
    %c0_i32_0 = arith.constant 0 : i32
    %c0_i32_1 = arith.constant 0 : i32
    return %c0_i32, %c0_i32_0 : i32, i32
  }
  func.func @transform_5(%arg0: i32, %arg1: i32) -> (i32, i32) {
    %c0_i32 = arith.constant 0 : i32
    %c0_i32_0 = arith.constant 0 : i32
    %c0_i32_1 = arith.constant 0 : i32
    return %c0_i32, %c0_i32_0 : i32, i32
  }
  func.func @transform_6(%arg0: i32, %arg1: i32) -> (i32, i32) {
    %c0_i32 = arith.constant 0 : i32
    %c0_i32_0 = arith.constant 0 : i32
    %c0_i32_1 = arith.constant 0 : i32
    return %c0_i32, %c0_i32_0 : i32, i32
  }
  func.func @transform_7(%arg0: i32, %arg1: i32) -> (i32, i32) {
    %c0_i32 = arith.constant 0 : i32
    %c0_i32_0 = arith.constant 0 : i32
    %c0_i32_1 = arith.constant 0 : i32
    return %c0_i32, %c0_i32_0 : i32, i32
  }
  func.func @transform_8(%arg0: i32, %arg1: i32) -> (i32, i32) {
    %c0_i32 = arith.constant 0 : i32
    %c0_i32_0 = arith.constant 0 : i32
    %c0_i32_1 = arith.constant 0 : i32
    return %c0_i32, %c0_i32_0 : i32, i32
  }
  func.func @transform_9(%arg0: i32, %arg1: i32) -> (i32, i32, i32) {
    %c0_i32 = arith.constant 0 : i32
    %c0_i32_0 = arith.constant 0 : i32
    return %arg1, %arg0, %c0_i32 : i32, i32, i32
  }
  func.func @transform_10(%arg0: i32, %arg1: i32) -> (i32, i32) {
    %c0_i32 = arith.constant 0 : i32
    %c0_i32_0 = arith.constant 0 : i32
    return %arg0, %c0_i32 : i32, i32
  }
}

</mosaic_0001>

<llo_original>
// kernel: _rnn_step_jit.1
$region0: #{_rnn_step_jit.1}
  #allocation0 [shape = 'u32[]', space=smem, size = 0x4, offset = 0x4, fixed_abs, tag = 'smem constant byte address 0x4 - core index']
  #allocation1 [shape = 'u32[72,128]{1,0:T(1,128)}', space=vmem, size = 0x9000, scoped, tag = 'internal scratch']
  %s0 = inlined_call_operand.vmem [shape: f32[1,8,16], index: 0, kind: input, shape index: {}]
  %s1 = inlined_call_operand.vmem [shape: f32[8,128], index: 1, kind: input, shape index: {}, may-alias: {1,10}]
  %s2 = inlined_call_operand.vmem [shape: f32[16,128], index: 2, kind: input, shape index: {}]
  %s3 = inlined_call_operand.vmem [shape: f32[1,128], index: 3, kind: input, shape index: {}]
  %s4 = inlined_call_operand.hbm [shape: f32[128,384], index: 4, kind: input, shape index: {}]
  %s5 = inlined_call_operand.hbm [shape: f32[128,384], index: 5, kind: input, shape index: {}]
  %s6 = inlined_call_operand.vmem [shape: f32[2,384], index: 6, kind: input, shape index: {}]
  %s7 = inlined_call_operand.hbm [shape: f32[128,128], index: 7, kind: input, shape index: {}]
  %s8 = inlined_call_operand.vmem [shape: f32[1,128], index: 8, kind: input, shape index: {}]
  %s9 = inlined_call_operand.vmem [shape: f32[1,8,128], index: 9, kind: output, shape index: {0}]
  %s10 = inlined_call_operand.vmem [shape: f32[8,128], index: 10, kind: output, shape index: {1}, may-alias: {1,10}]
  %11 = xla_tuple %s9, %s10
  %s12 = sld [smem:[#allocation0]]
  $region70: #{_rnn_step_jit.1} parent=0
    _
  %s14 = ssub.s32 1, %s12
  %s15 = scalar_select 0, %s14, %s12
  $region1: #{_rnn_step_jit.1} parent=0
    #allocation2 [shape = 'u8[196608]{0}', space=vmem, size = 0x30000, scoped, tag = 'input window, operand 4, single buffered']
    #allocation3 [shape = 's32[1]{0}', space=sflag, size = 0x4, scoped, tag = 'scoped memory for _rnn_step_jit.1']
    #allocation4 [shape = 'u8[196608]{0}', space=vmem, size = 0x30000, scoped, tag = 'input window, operand 5, single buffered']
    #allocation5 [shape = 's32[1]{0}', space=sflag, size = 0x4, scoped, tag = 'scoped memory for _rnn_step_jit.1']
    #allocation6 [shape = 'u8[65536]{0}', space=vmem, size = 0x10000, scoped, tag = 'input window, operand 7, single buffered']
    %16 = vsyncpa [#allocation3], 0
    %17 = vsyncpa [#allocation5], 0
    // Predicated region
    $region2: #{_rnn_step_jit.1} parent=1 // pred_check
      _
    $region3: #{_rnn_step_jit.1} parent=1 // pred_check_branch
      %19 = sbr.rel (0) target = $region5
    $region4: #{_rnn_step_jit.1} parent=1 // pred_region
      _
    $region5: #{_rnn_step_jit.1} parent=1 // pred_fallthru
      _
    // Predicated region
    $region6: #{_rnn_step_jit.1} parent=1 // pred_check
      _
    $region7: #{_rnn_step_jit.1} parent=1 // pred_check_branch
      %21 = sbr.rel (0) target = $region9
    $region8: #{_rnn_step_jit.1} parent=1 // pred_region
      _
    $region9: #{_rnn_step_jit.1} parent=1 // pred_fallthru
      _
    // Predicated region
    $region10: #{_rnn_step_jit.1} parent=1 // pred_check
      _
    $region11: #{_rnn_step_jit.1} parent=1 // pred_check_branch
      %23 = sbr.rel (0) target = $region13
    $region12: #{_rnn_step_jit.1} parent=1 // pred_region
      _
    $region13: #{_rnn_step_jit.1} parent=1 // pred_fallthru
      _
    // Predicated region
    $region14: #{_rnn_step_jit.1} parent=1 // pred_check
      _
    $region15: #{_rnn_step_jit.1} parent=1 // pred_check_branch
      %25 = sbr.rel (0) target = $region17
    $region16: #{_rnn_step_jit.1} parent=1 // pred_region
      _
    $region17: #{_rnn_step_jit.1} parent=1 // pred_fallthru
      _
    // Predicated region
    $region18: #{_rnn_step_jit.1} parent=1 // pred_check
      _
    $region19: #{_rnn_step_jit.1} parent=1 // pred_check_branch
      %27 = sbr.rel (0) target = $region21
    $region20: #{_rnn_step_jit.1} parent=1 // pred_region
      %29 = vsyncadd [#allocation3], 0
      %s30 = sshll.u32 %s4, 4
      %s31 = int_to_ptr.hbm [resolvable:$true] %s30
      %s32 = sshll.u32 [#allocation2], 4
      %s33 = int_to_ptr.vmem [resolvable:$true] %s32
      %38 = dma.hbm_to_vmem [thread:$0]  %s31, 6144, %s33, [#allocation3], 384, 384, 24
    $region21: #{_rnn_step_jit.1} parent=1 // pred_fallthru
      _
    // Predicated region
    $region22: #{_rnn_step_jit.1} parent=1 // pred_check
      _
    $region23: #{_rnn_step_jit.1} parent=1 // pred_check_branch
      %40 = sbr.rel (0) target = $region25
    $region24: #{_rnn_step_jit.1} parent=1 // pred_region
      %42 = vsyncadd [#allocation5], 0
      %s43 = sshll.u32 %s5, 4
      %s44 = int_to_ptr.hbm [resolvable:$true] %s43
      %s45 = sshll.u32 [#allocation4], 4
      %s46 = int_to_ptr.vmem [resolvable:$true] %s45
      %51 = dma.hbm_to_vmem [thread:$0]  %s44, 6144, %s46, [#allocation5], 384, 384, 24
    $region25: #{_rnn_step_jit.1} parent=1 // pred_fallthru
      _
    // Predicated region
    $region26: #{_rnn_step_jit.1} parent=1 // pred_check
      _
    $region27: #{_rnn_step_jit.1} parent=1 // pred_check_branch
      %53 = sbr.rel (0) target = $region29
    $region28: #{_rnn_step_jit.1} parent=1 // pred_region
      _
    $region29: #{_rnn_step_jit.1} parent=1 // pred_fallthru
      _
    // Predicated region
    $region30: #{_rnn_step_jit.1} parent=1 // pred_check
      _
    $region31: #{_rnn_step_jit.1} parent=1 // pred_check_branch
      %55 = sbr.rel (0) target = $region33
    $region32: #{_rnn_step_jit.1} parent=1 // pred_region
      %57 = vsyncadd [#allocation5], 0
      %s58 = sshll.u32 %s7, 4
      %s59 = int_to_ptr.hbm [resolvable:$true] %s58
      %s60 = sshll.u32 [#allocation6], 4
      %s61 = int_to_ptr.vmem [resolvable:$true] %s60
      %66 = dma.hbm_to_vmem [thread:$0]  %s59, 2048, %s61, [#allocation5], 128, 128, 8
    $region33: #{_rnn_step_jit.1} parent=1 // pred_fallthru
      _
    // Predicated region
    $region34: #{_rnn_step_jit.1} parent=1 // pred_check
      _
    $region35: #{_rnn_step_jit.1} parent=1 // pred_check_branch
      %68 = sbr.rel (0) target = $region37
    $region36: #{_rnn_step_jit.1} parent=1 // pred_region
      _
    $region37: #{_rnn_step_jit.1} parent=1 // pred_fallthru
      _
    // Predicated region
    $region38: #{_rnn_step_jit.1} parent=1 // pred_check
      _
    $region39: #{_rnn_step_jit.1} parent=1 // pred_check_branch
      %70 = sbr.rel (0) target = $region41
    $region40: #{_rnn_step_jit.1} parent=1 // pred_region
      %72 = dma.done [#allocation3], 6144
    $region41: #{_rnn_step_jit.1} parent=1 // pred_fallthru
      _
    // Predicated region
    $region42: #{_rnn_step_jit.1} parent=1 // pred_check
      _
    $region43: #{_rnn_step_jit.1} parent=1 // pred_check_branch
      %74 = sbr.rel (0) target = $region45
    $region44: #{_rnn_step_jit.1} parent=1 // pred_region
      %76 = dma.done [#allocation5], 6144
    $region45: #{_rnn_step_jit.1} parent=1 // pred_fallthru
      _
    // Predicated region
    $region46: #{_rnn_step_jit.1} parent=1 // pred_check
      _
    $region47: #{_rnn_step_jit.1} parent=1 // pred_check_branch
      %78 = sbr.rel (0) target = $region49
    $region48: #{_rnn_step_jit.1} parent=1 // pred_region
      %80 = dma.done [#allocation5], 2048
    $region49: #{_rnn_step_jit.1} parent=1 // pred_fallthru
      _
    %p81 = scmp.eq.s32.totalorder 0, 0
    // Predicated region
    $region50: #{_rnn_step_jit.1} parent=1 // pred_check
      %p82 = pneg %p81
    $region51: #{_rnn_step_jit.1} parent=1 // pred_check_branch
      %84 = sbr.rel (%p82) target = $region53
    $region52: #{_rnn_step_jit.1} parent=1 // pred_region
      %v85 = vld [vmem:[%s1] sm:$0xff]
      %86 = vst [vmem:[%s10] sm:$0xff] %v85
    $region53: #{_rnn_step_jit.1} parent=1 // pred_fallthru
      _
    %v87 = vld [vmem:[%s10] sm:$0xff]
    %v88 = vld [vmem:[%s0] sm:$0xff]
    %v89 = vld [vmem:[%s2] sm:$0xff]
    %v90 = vld [vmem:[%s2 + $0x8] sm:$0xff]
    %v91 = vld [vmem:[%s3] sm:$0x1]
    %v93 = vperm.slane %v91, 0
    %vm95 = vcmask 130048
    %v97 = vsel %vm95, %v88, 0
    %99 = vmatpush.msra.mxu0 0.0
    %100 = vmatpush.msra.mxu0 0.0
    %101 = vmatpush.msra.mxu0 0.0
    %102 = vmatpush.msra.mxu0 0.0
    %103 = vmatpush.msra.mxu0 0.0
    %104 = vmatpush.msra.mxu0 0.0
    %105 = vmatpush.msra.mxu0 0.0
    %106 = vmatpush.msra.mxu0 0.0
    %107 = vmatpush.msra.mxu0 0.0
    %108 = vmatpush.msra.mxu0 0.0
    %109 = vmatpush.msra.mxu0 0.0
    %110 = vmatpush.msra.mxu0 0.0
    %111 = vmatpush.msra.mxu0 0.0
    %112 = vmatpush.msra.mxu0 0.0
    %113 = vmatpush.msra.mxu0 %v90
    %114 = vmatpush.msra.mxu0 %v89
    %115 = vmatmul.f32.gmra.mxu0 %v97
    %v116 = vpop.f32.mrf.mxu0
    %v117 = vadd.f32 %v93, %v116
    %118 = vdwg.mxu0
    %v119 = vmax.f32 %v117, 0.0
    %v120 = vld [vmem:[%s6] sm:$0x3f]
    %v121 = vld [vmem:[#allocation2] sm:$0xff]
    %v122 = vld [vmem:[#allocation2 + $0x8] sm:$0xff]
    %v123 = vld [vmem:[#allocation2 + $0x10] sm:$0xff]
    %v124 = vld [vmem:[#allocation2 + $0x18] sm:$0xff]
    %v125 = vld [vmem:[#allocation2 + $0x20] sm:$0xff]
    %v126 = vld [vmem:[#allocation2 + $0x28] sm:$0xff]
    %v127 = vld [vmem:[#allocation2 + $0x30] sm:$0xff]
    %v128 = vld [vmem:[#allocation2 + $0x38] sm:$0xff]
    %v129 = vld [vmem:[#allocation2 + $0x40] sm:$0xff]
    %v130 = vld [vmem:[#allocation2 + $0x48] sm:$0xff]
    %v131 = vld [vmem:[#allocation2 + $0x50] sm:$0xff]
    %v132 = vld [vmem:[#allocation2 + $0x58] sm:$0xff]
    %v133 = vld [vmem:[#allocation2 + $0x60] sm:$0xff]
    %v134 = vld [vmem:[#allocation2 + $0x68] sm:$0xff]
    %v135 = vld [vmem:[#allocation2 + $0x70] sm:$0xff]
    %v136 = vld [vmem:[#allocation2 + $0x78] sm:$0xff]
    %v137 = vld [vmem:[#allocation2 + $0x80] sm:$0xff]
    %v138 = vld [vmem:[#allocation2 + $0x88] sm:$0xff]
    %v139 = vld [vmem:[#allocation2 + $0x90] sm:$0xff]
    %v140 = vld [vmem:[#allocation2 + $0x98] sm:$0xff]
    %v141 = vld [vmem:[#allocation2 + $0xa0] sm:$0xff]
    %v142 = vld [vmem:[#allocation2 + $0xa8] sm:$0xff]
    %v143 = vld [vmem:[#allocation2 + $0xb0] sm:$0xff]
    %v144 = vld [vmem:[#allocation2 + $0xb8] sm:$0xff]
    %v145 = vld [vmem:[#allocation2 + $0xc0] sm:$0xff]
    %v146 = vld [vmem:[#allocation2 + $0xc8] sm:$0xff]
    %v147 = vld [vmem:[#allocation2 + $0xd0] sm:$0xff]
    %v148 = vld [vmem:[#allocation2 + $0xd8] sm:$0xff]
    %v149 = vld [vmem:[#allocation2 + $0xe0] sm:$0xff]
    %v150 = vld [vmem:[#allocation2 + $0xe8] sm:$0xff]
    %v151 = vld [vmem:[#allocation2 + $0xf0] sm:$0xff]
    %v152 = vld [vmem:[#allocation2 + $0xf8] sm:$0xff]
    %v153 = vld [vmem:[#allocation2 + $0x100] sm:$0xff]
    %v154 = vld [vmem:[#allocation2 + $0x108] sm:$0xff]
    %v155 = vld [vmem:[#allocation2 + $0x110] sm:$0xff]
    %v156 = vld [vmem:[#allocation2 + $0x118] sm:$0xff]
    %v157 = vld [vmem:[#allocation2 + $0x120] sm:$0xff]
    %v158 = vld [vmem:[#allocation2 + $0x128] sm:$0xff]
    %v159 = vld [vmem:[#allocation2 + $0x130] sm:$0xff]
    %v160 = vld [vmem:[#allocation2 + $0x138] sm:$0xff]
    %v161 = vld [vmem:[#allocation2 + $0x140] sm:$0xff]
    %v162 = vld [vmem:[#allocation2 + $0x148] sm:$0xff]
    %v163 = vld [vmem:[#allocation2 + $0x150] sm:$0xff]
    %v164 = vld [vmem:[#allocation2 + $0x158] sm:$0xff]
    %v165 = vld [vmem:[#allocation2 + $0x160] sm:$0xff]
    %v166 = vld [vmem:[#allocation2 + $0x168] sm:$0xff]
    %v167 = vld [vmem:[#allocation2 + $0x170] sm:$0xff]
    %v168 = vld [vmem:[#allocation2 + $0x178] sm:$0xff]
    %v170 = vperm.slane %v120, 0
    %v171 = vperm.slane %v120, 2
    %v172 = vperm.slane %v120, 4
    %v176 = vperm.slane %v170, 0
    %v177 = vperm.slane %v171, 0
    %v178 = vperm.slane %v172, 0
    %179 = vmatpush.msra.mxu0 %v166
    %180 = vmatpush.msra.mxu0 %v163
    %181 = vmatpush.msra.mxu0 %v160
    %182 = vmatpush.msra.mxu0 %v157
    %183 = vmatpush.msra.mxu0 %v154
    %184 = vmatpush.msra.mxu0 %v151
    %185 = vmatpush.msra.mxu0 %v148
    %186 = vmatpush.msra.mxu0 %v145
    %187 = vmatpush.msra.mxu0 %v142
    %188 = vmatpush.msra.mxu0 %v139
    %189 = vmatpush.msra.mxu0 %v136
    %190 = vmatpush.msra.mxu0 %v133
    %191 = vmatpush.msra.mxu0 %v130
    %192 = vmatpush.msra.mxu0 %v127
    %193 = vmatpush.msra.mxu0 %v124
    %194 = vmatpush.msra.mxu0 %v121
    %195 = vmatmul.f32.gmra.mxu0 %v119
    %v196 = vpop.f32.mrf.mxu0
    %v197 = vadd.f32 %v176, %v196
    %198 = vdwg.mxu0
    %199 = vmatpush.msra.mxu0 %v167
    %200 = vmatpush.msra.mxu0 %v164
    %201 = vmatpush.msra.mxu0 %v161
    %202 = vmatpush.msra.mxu0 %v158
    %203 = vmatpush.msra.mxu0 %v155
    %204 = vmatpush.msra.mxu0 %v152
    %205 = vmatpush.msra.mxu0 %v149
    %206 = vmatpush.msra.mxu0 %v146
    %207 = vmatpush.msra.mxu0 %v143
    %208 = vmatpush.msra.mxu0 %v140
    %209 = vmatpush.msra.mxu0 %v137
    %210 = vmatpush.msra.mxu0 %v134
    %211 = vmatpush.msra.mxu0 %v131
    %212 = vmatpush.msra.mxu0 %v128
    %213 = vmatpush.msra.mxu0 %v125
    %214 = vmatpush.msra.mxu0 %v122
    %215 = vmatmul.f32.gmra.mxu0 %v119
    %v216 = vpop.f32.mrf.mxu0
    %v217 = vadd.f32 %v177, %v216
    %218 = vdwg.mxu0
    %219 = vmatpush.msra.mxu0 %v168
    %220 = vmatpush.msra.mxu0 %v165
    %221 = vmatpush.msra.mxu0 %v162
    %222 = vmatpush.msra.mxu0 %v159
    %223 = vmatpush.msra.mxu0 %v156
    %224 = vmatpush.msra.mxu0 %v153
    %225 = vmatpush.msra.mxu0 %v150
    %226 = vmatpush.msra.mxu0 %v147
    %227 = vmatpush.msra.mxu0 %v144
    %228 = vmatpush.msra.mxu0 %v141
    %229 = vmatpush.msra.mxu0 %v138
    %230 = vmatpush.msra.mxu0 %v135
    %231 = vmatpush.msra.mxu0 %v132
    %232 = vmatpush.msra.mxu0 %v129
    %233 = vmatpush.msra.mxu0 %v126
    %234 = vmatpush.msra.mxu0 %v123
    %235 = vmatmul.f32.gmra.mxu0 %v119
    %v236 = vpop.f32.mrf.mxu0
    %v237 = vadd.f32 %v178, %v236
    %238 = vdwg.mxu0
    %v239 = vld [vmem:[#allocation4] sm:$0xff]
    %v240 = vld [vmem:[#allocation4 + $0x8] sm:$0xff]
    %v241 = vld [vmem:[#allocation4 + $0x10] sm:$0xff]
    %v242 = vld [vmem:[#allocation4 + $0x18] sm:$0xff]
    %v243 = vld [vmem:[#allocation4 + $0x20] sm:$0xff]
    %v244 = vld [vmem:[#allocation4 + $0x28] sm:$0xff]
    %v245 = vld [vmem:[#allocation4 + $0x30] sm:$0xff]
    %v246 = vld [vmem:[#allocation4 + $0x38] sm:$0xff]
    %v247 = vld [vmem:[#allocation4 + $0x40] sm:$0xff]
    %v248 = vld [vmem:[#allocation4 + $0x48] sm:$0xff]
    %v249 = vld [vmem:[#allocation4 + $0x50] sm:$0xff]
    %v250 = vld [vmem:[#allocation4 + $0x58] sm:$0xff]
    %v251 = vld [vmem:[#allocation4 + $0x60] sm:$0xff]
    %v252 = vld [vmem:[#allocation4 + $0x68] sm:$0xff]
    %v253 = vld [vmem:[#allocation4 + $0x70] sm:$0xff]
    %v254 = vld [vmem:[#allocation4 + $0x78] sm:$0xff]
    %v255 = vld [vmem:[#allocation4 + $0x80] sm:$0xff]
    %v256 = vld [vmem:[#allocation4 + $0x88] sm:$0xff]
    %v257 = vld [vmem:[#allocation4 + $0x90] sm:$0xff]
    %v258 = vld [vmem:[#allocation4 + $0x98] sm:$0xff]
    %v259 = vld [vmem:[#allocation4 + $0xa0] sm:$0xff]
    %v260 = vld [vmem:[#allocation4 + $0xa8] sm:$0xff]
    %v261 = vld [vmem:[#allocation4 + $0xb0] sm:$0xff]
    %v262 = vld [vmem:[#allocation4 + $0xb8] sm:$0xff]
    %v263 = vld [vmem:[#allocation4 + $0xc0] sm:$0xff]
    %v264 = vld [vmem:[#allocation4 + $0xc8] sm:$0xff]
    %v265 = vld [vmem:[#allocation4 + $0xd0] sm:$0xff]
    %v266 = vld [vmem:[#allocation4 + $0xd8] sm:$0xff]
    %v267 = vld [vmem:[#allocation4 + $0xe0] sm:$0xff]
    %v268 = vld [vmem:[#allocation4 + $0xe8] sm:$0xff]
    %v269 = vld [vmem:[#allocation4 + $0xf0] sm:$0xff]
    %v270 = vld [vmem:[#allocation4 + $0xf8] sm:$0xff]
    %v271 = vld [vmem:[#allocation4 + $0x100] sm:$0xff]
    %v272 = vld [vmem:[#allocation4 + $0x108] sm:$0xff]
    %v273 = vld [vmem:[#allocation4 + $0x110] sm:$0xff]
    %v274 = vld [vmem:[#allocation4 + $0x118] sm:$0xff]
    %v275 = vld [vmem:[#allocation4 + $0x120] sm:$0xff]
    %v276 = vld [vmem:[#allocation4 + $0x128] sm:$0xff]
    %v277 = vld [vmem:[#allocation4 + $0x130] sm:$0xff]
    %v278 = vld [vmem:[#allocation4 + $0x138] sm:$0xff]
    %v279 = vld [vmem:[#allocation4 + $0x140] sm:$0xff]
    %v280 = vld [vmem:[#allocation4 + $0x148] sm:$0xff]
    %v281 = vld [vmem:[#allocation4 + $0x150] sm:$0xff]
    %v282 = vld [vmem:[#allocation4 + $0x158] sm:$0xff]
    %v283 = vld [vmem:[#allocation4 + $0x160] sm:$0xff]
    %v284 = vld [vmem:[#allocation4 + $0x168] sm:$0xff]
    %v285 = vld [vmem:[#allocation4 + $0x170] sm:$0xff]
    %v286 = vld [vmem:[#allocation4 + $0x178] sm:$0xff]
    %v287 = vperm.slane %v120, 1
    %v288 = vperm.slane %v120, 3
    %v289 = vperm.slane %v120, 5
    %v293 = vperm.slane %v287, 1
    %v294 = vperm.slane %v288, 1
    %v295 = vperm.slane %v289, 1
    %296 = vmatpush.msra.mxu0 %v284
    %297 = vmatpush.msra.mxu0 %v281
    %298 = vmatpush.msra.mxu0 %v278
    %299 = vmatpush.msra.mxu0 %v275
    %300 = vmatpush.msra.mxu0 %v272
    %301 = vmatpush.msra.mxu0 %v269
    %302 = vmatpush.msra.mxu0 %v266
    %303 = vmatpush.msra.mxu0 %v263
    %304 = vmatpush.msra.mxu0 %v260
    %305 = vmatpush.msra.mxu0 %v257
    %306 = vmatpush.msra.mxu0 %v254
    %307 = vmatpush.msra.mxu0 %v251
    %308 = vmatpush.msra.mxu0 %v248
    %309 = vmatpush.msra.mxu0 %v245
    %310 = vmatpush.msra.mxu0 %v242
    %311 = vmatpush.msra.mxu0 %v239
    %312 = vmatmul.f32.gmra.mxu0 %v87
    %v313 = vpop.f32.mrf.mxu0
    %v314 = vadd.f32 %v293, %v313
    %315 = vdwg.mxu0
    %316 = vmatpush.msra.mxu0 %v285
    %317 = vmatpush.msra.mxu0 %v282
    %318 = vmatpush.msra.mxu0 %v279
    %319 = vmatpush.msra.mxu0 %v276
    %320 = vmatpush.msra.mxu0 %v273
    %321 = vmatpush.msra.mxu0 %v270
    %322 = vmatpush.msra.mxu0 %v267
    %323 = vmatpush.msra.mxu0 %v264
    %324 = vmatpush.msra.mxu0 %v261
    %325 = vmatpush.msra.mxu0 %v258
    %326 = vmatpush.msra.mxu0 %v255
    %327 = vmatpush.msra.mxu0 %v252
    %328 = vmatpush.msra.mxu0 %v249
    %329 = vmatpush.msra.mxu0 %v246
    %330 = vmatpush.msra.mxu0 %v243
    %331 = vmatpush.msra.mxu0 %v240
    %332 = vmatmul.f32.gmra.mxu0 %v87
    %v333 = vpop.f32.mrf.mxu0
    %v334 = vadd.f32 %v294, %v333
    %335 = vdwg.mxu0
    %336 = vmatpush.msra.mxu0 %v286
    %337 = vmatpush.msra.mxu0 %v283
    %338 = vmatpush.msra.mxu0 %v280
    %339 = vmatpush.msra.mxu0 %v277
    %340 = vmatpush.msra.mxu0 %v274
    %341 = vmatpush.msra.mxu0 %v271
    %342 = vmatpush.msra.mxu0 %v268
    %343 = vmatpush.msra.mxu0 %v265
    %344 = vmatpush.msra.mxu0 %v262
    %345 = vmatpush.msra.mxu0 %v259
    %346 = vmatpush.msra.mxu0 %v256
    %347 = vmatpush.msra.mxu0 %v253
    %348 = vmatpush.msra.mxu0 %v250
    %349 = vmatpush.msra.mxu0 %v247
    %350 = vmatpush.msra.mxu0 %v244
    %351 = vmatpush.msra.mxu0 %v241
    %352 = vmatmul.f32.gmra.mxu0 %v87
    %v353 = vpop.f32.mrf.mxu0
    %v354 = vadd.f32 %v295, %v353
    %355 = vdwg.mxu0
    %v356 = vadd.f32 %v197, %v314
    %v357 = vxor.u32 %v356, 2147483648
    %v358 = vmul.f32 %v357, 1.442695
    %v359 = vpow.pop %v358
    %v360 = vadd.f32 %v359, 1.0
    %v361 = vrcp.pop %v360
    %v362 = vmul.f32 %v360, %v361
    %v363 = vsub.f32 1.0, %v362
    %v364 = vmul.f32 %v361, %v363
    %v365 = vadd.f32 %v361, %v364
    %vm366 = vweird.f32 %v360
    %vm367 = vweird.f32 %v361
    %vm368 = vmor %vm366, %vm367
    %v369 = vsel %vm368, %v361, %v365
    %v370 = vand.u32 2147483647, %v360
    %vm371 = vcmp.eq.f32.partialorder %v370, 8.507059e+37
    %v372 = vand.u32 %v360, 2147483648
    %v373 = vor.u32 1.1754944e-38, %v372
    %v374 = vsel %vm371, %v373, %v369
    %v375 = vmul.f32 1.0, %v374
    %v376 = vadd.f32 %v217, %v334
    %v377 = vxor.u32 %v376, 2147483648
    %v378 = vmul.f32 %v377, 1.442695
    %v379 = vpow.pop %v378
    %v380 = vadd.f32 %v379, 1.0
    %v381 = vrcp.pop %v380
    %v382 = vmul.f32 %v380, %v381
    %v383 = vsub.f32 1.0, %v382
    %v384 = vmul.f32 %v381, %v383
    %v385 = vadd.f32 %v381, %v384
    %vm386 = vweird.f32 %v380
    %vm387 = vweird.f32 %v381
    %vm388 = vmor %vm386, %vm387
    %v389 = vsel %vm388, %v381, %v385
    %v390 = vand.u32 2147483647, %v380
    %vm391 = vcmp.eq.f32.partialorder %v390, 8.507059e+37
    %v392 = vand.u32 %v380, 2147483648
    %v393 = vor.u32 1.1754944e-38, %v392
    %v394 = vsel %vm391, %v393, %v389
    %v395 = vmul.f32 1.0, %v394
    %v396 = vmul.f32 %v375, %v354
    %v397 = vadd.f32 %v237, %v396
    %v398 = vtanh.pop %v397
    %v399 = vsub.f32 1.0, %v395
    %v400 = vmul.f32 %v399, %v398
    %v401 = vmul.f32 %v395, %v87
    %v402 = vadd.f32 %v400, %v401
    %v403 = vld [vmem:[#allocation6] sm:$0xff]
    %v404 = vld [vmem:[#allocation6 + $0x8] sm:$0xff]
    %v405 = vld [vmem:[#allocation6 + $0x10] sm:$0xff]
    %v406 = vld [vmem:[#allocation6 + $0x18] sm:$0xff]
    %v407 = vld [vmem:[#allocation6 + $0x20] sm:$0xff]
    %v408 = vld [vmem:[#allocation6 + $0x28] sm:$0xff]
    %v409 = vld [vmem:[#allocation6 + $0x30] sm:$0xff]
    %v410 = vld [vmem:[#allocation6 + $0x38] sm:$0xff]
    %v411 = vld [vmem:[#allocation6 + $0x40] sm:$0xff]
    %v412 = vld [vmem:[#allocation6 + $0x48] sm:$0xff]
    %v413 = vld [vmem:[#allocation6 + $0x50] sm:$0xff]
    %v414 = vld [vmem:[#allocation6 + $0x58] sm:$0xff]
    %v415 = vld [vmem:[#allocation6 + $0x60] sm:$0xff]
    %v416 = vld [vmem:[#allocation6 + $0x68] sm:$0xff]
    %v417 = vld [vmem:[#allocation6 + $0x70] sm:$0xff]
    %v418 = vld [vmem:[#allocation6 + $0x78] sm:$0xff]
    %v419 = vld [vmem:[%s8] sm:$0x1]
    %v421 = vperm.slane %v419, 0
    %423 = vmatpush.msra.mxu0 %v418
    %424 = vmatpush.msra.mxu0 %v417
    %425 = vmatpush.msra.mxu0 %v416
    %426 = vmatpush.msra.mxu0 %v415
    %427 = vmatpush.msra.mxu0 %v414
    %428 = vmatpush.msra.mxu0 %v413
    %429 = vmatpush.msra.mxu0 %v412
    %430 = vmatpush.msra.mxu0 %v411
    %431 = vmatpush.msra.mxu0 %v410
    %432 = vmatpush.msra.mxu0 %v409
    %433 = vmatpush.msra.mxu0 %v408
    %434 = vmatpush.msra.mxu0 %v407
    %435 = vmatpush.msra.mxu0 %v406
    %436 = vmatpush.msra.mxu0 %v405
    %437 = vmatpush.msra.mxu0 %v404
    %438 = vmatpush.msra.mxu0 %v403
    %439 = vmatmul.f32.gmra.mxu0 %v402
    %v440 = vpop.f32.mrf.mxu0
    %v441 = vadd.f32 %v421, %v440
    %442 = vdwg.mxu0
    %443 = vst [vmem:[%s9] sm:$0xff] %v441
    %444 = vst [vmem:[%s10] sm:$0xff] %v402
    // Predicated region
    $region54: #{_rnn_step_jit.1} parent=1 // pred_check
      _
    $region55: #{_rnn_step_jit.1} parent=1 // pred_check_branch
      %446 = sbr.rel (0) target = $region57
    $region56: #{_rnn_step_jit.1} parent=1 // pred_region
      _
    $region57: #{_rnn_step_jit.1} parent=1 // pred_fallthru
      _
    // Predicated region
    $region58: #{_rnn_step_jit.1} parent=1 // pred_check
      _
    $region59: #{_rnn_step_jit.1} parent=1 // pred_check_branch
      %448 = sbr.rel (0) target = $region61
    $region60: #{_rnn_step_jit.1} parent=1 // pred_region
      _
    $region61: #{_rnn_step_jit.1} parent=1 // pred_fallthru
      _
    // Predicated region
    $region62: #{_rnn_step_jit.1} parent=1 // pred_check
      _
    $region63: #{_rnn_step_jit.1} parent=1 // pred_check_branch
      %450 = sbr.rel (0) target = $region65
    $region64: #{_rnn_step_jit.1} parent=1 // pred_region
      _
    $region65: #{_rnn_step_jit.1} parent=1 // pred_fallthru
      _
    // Predicated region
    $region66: #{_rnn_step_jit.1} parent=1 // pred_check
      _
    $region67: #{_rnn_step_jit.1} parent=1 // pred_check_branch
      %452 = sbr.rel (0) target = $region69
    $region68: #{_rnn_step_jit.1} parent=1 // pred_region
      _
    $region69: #{_rnn_step_jit.1} parent=1 // pred_fallthru
      _
    %453 = vsyncpa [#allocation3], 1
    %454 = vsyncpa [#allocation5], 1

</llo_original>
